<compile_context>
chip_gen: v6e
topology: v6e:2x2x1
jax: 0.10.0
libtpu: 0.0.40
codegen_flags: <defaults>
</compile_context>

<pallas_src>
import jax
import jax.numpy as jnp
from jax.experimental import pallas as pl
from jax.experimental.pallas import tpu as pltpu


def _combine_kernel(w_ref, x_ref, o_ref):
    """w_ref: SMEM [L] (scalar prefetch); x_ref: VMEM [L, tile_r, W];
    o_ref: VMEM [tile_r, W].

    Weighted sum over the fully-resident layer axis, accumulated in f32 vregs;
    single lane-dense store at the end (no scratch, no reduction grid axis).
    """
    num_layers = x_ref.shape[0]
    acc = w_ref[0] * x_ref[0, :, :].astype(jnp.float32)
    for l in range(1, num_layers):  # static unroll; L is small
        acc = acc + w_ref[l] * x_ref[l, :, :].astype(jnp.float32)
    o_ref[...] = acc.astype(o_ref.dtype)


def _round_up(x: int, m: int) -> int:
    return -(-x // m) * m


def _sublane_multiple(dtype) -> int:
    """Native sublane packing multiple: 8 for f32, 16 for bf16, 32 for int8/fp8."""
    return max(8, 32 // jnp.dtype(dtype).itemsize)


def _vmem_budget_and_limit():
    """Generation-aware double-buffered block budget and scoped VMEM limit."""
    cap = None
    try:
        cap = int(getattr(pltpu.get_tpu_info(), "vmem_capacity_bytes", 0))
    except Exception:
        cap = None
    if not cap or cap <= 0:
        cap = 64 * 1024 * 1024  # conservative default (v7x per-TC size)
    if cap <= 64 * 1024 * 1024:
        # v7x: 64 MiB per TensorCore — biggest tiles that still leave Mosaic
        # internal-scratch headroom; 2 TCs share the grid, so prefer_split.
        return 40 * 1024 * 1024, 52 * 1024 * 1024, True
    # v5e / v6e: 128 MiB physical VMEM — use most of it.
    return 80 * 1024 * 1024, 100 * 1024 * 1024, False


def _pick_lane_width(n: int) -> int:
    """Largest lane-dense width (multiple of 128) dividing n; 0 if none."""
    for w in (2048, 1024, 512, 256, 128):
        if n % w == 0:
            return w
    return 0  # caller pads the flattened axis


def _pick_tile_rows(rows: int, in_row_bytes: int, out_row_bytes: int,
                    vmem_budget: int, sub: int, prefer_split: bool) -> int:
    """Rows of the [R, W] view per grid step.

    Constraints: tile is a multiple of `sub` (dtype sublane packing) unless it
    equals `rows`; double-buffered footprint 2*(in_block + out_block) fits the
    budget.  With prefer_split (v7x), bias toward an even grid-step count so
    the 'parallel' axis splits evenly across the 2 TensorCores.  The grid uses
    pl.cdiv, so a partial last tile is fine (masked boundary handling).
    """
    per_row = 2 * (in_row_bytes + out_row_bytes)
    max_rows = max(1, vmem_budget // per_row)

    if max_rows >= rows:
        # Whole array fits in one double-buffered tile.
        if prefer_split and rows >= 2 * sub:
            tile = _round_up(pl.cdiv(rows, 2), sub)
            if tile < rows:
                return tile
        return rows

    tile = max(sub, (max_rows // sub) * sub)
    if tile >= rows:
        return rows
    steps = pl.cdiv(rows, tile)
    if prefer_split and steps > 1 and steps % 2 == 1:
        # Shrink slightly so the step count becomes even (2-TC balance).
        tile_even = _round_up(pl.cdiv(rows, steps + 1), sub)
        if sub <= tile_even < rows and pl.cdiv(rows, tile_even) % 2 == 0:
            tile = tile_even
    return tile


def learnable_layer_combine(weight: jax.Array, x: jax.Array) -> jax.Array:
    """weight: [L] float32, x: [L, S, H] -> [S, H]."""
    L, S, H = x.shape
    assert weight.shape == (L,)

    # Lane-dense layout: flatten (S, H) -> (R, W), W a big multiple of 128.
    n = S * H
    x_flat = x.reshape(L, n)
    W = _pick_lane_width(n)
    if W == 0:
        # Awkward shape: pad the flattened axis up to a multiple of the lane
        # width so stores stay full-width and pipelining is preserved.
        W = 512 if n >= 512 else 128
        n_pad = _round_up(n, W)
        x_flat = jnp.pad(x_flat, ((0, 0), (0, n_pad - n)))
    else:
        n_pad = n
    R = n_pad // W
    x_rw = x_flat.reshape(L, R, W)

    itemsize = jnp.dtype(x.dtype).itemsize
    vmem_budget, vmem_limit, prefer_split = _vmem_budget_and_limit()
    sub = _sublane_multiple(x.dtype)
    tile_r = _pick_tile_rows(R, L * W * itemsize, W * itemsize,
                             vmem_budget, sub, prefer_split)
    grid = (pl.cdiv(R, tile_r),)

    grid_spec = pltpu.PrefetchScalarGridSpec(
        num_scalar_prefetch=1,  # weight lives in SMEM
        grid=grid,
        in_specs=[
            # All L layers of one row-tile per step; the layer reduction is
            # fused in-kernel, so there is no reduction grid axis.
            pl.BlockSpec((L, tile_r, W), lambda r, w: (0, r, 0)),
        ],
        out_specs=pl.BlockSpec((tile_r, W), lambda r, w: (r, 0)),
    )

    cost = pl.CostEstimate(
        flops=2 * L * S * H,
        transcendentals=0,
        bytes_accessed=(L + 1) * S * H * itemsize + L * jnp.dtype(weight.dtype).itemsize,
    )

    y_rw = pl.pallas_call(
        _combine_kernel,
        out_shape=jax.ShapeDtypeStruct((R, W), x.dtype),
        grid_spec=grid_spec,
        compiler_params=pltpu.CompilerParams(
            # Pure data-parallel grid: v7x's 2 TensorCores can split the tiles.
            dimension_semantics=("parallel",),
            vmem_limit_bytes=vmem_limit,
        ),
        cost_estimate=cost,
    )(weight, x_rw)

    return y_rw.reshape(R * W)[:n].reshape(S, H)


if __name__ == "__main__":
    # Shapes implied by the module: num_layers=2, seq_len=8, hidden=32.
    L, S, H = 2, 8, 32

    key = jax.random.PRNGKey(0)
    k_w, k_x = jax.random.split(key)
    # Deterministic parameter init (nn.Parameter(torch.FloatTensor(L)) is
    # uninitialized memory in PyTorch; we init from the PRNG instead).
    weight = jax.random.normal(k_w, (L,), dtype=jnp.float32)
    x = jax.random.normal(k_x, (L, S, H), dtype=jnp.float32)

    y = learnable_layer_combine(weight, x)
    y = jax.block_until_ready(y)

    # Correctness check against pure-JAX reference.
    y_ref = jnp.einsum("l,lsh->sh", weight, x)
    assert y.shape == (S, H)
    assert jnp.allclose(y, y_ref, atol=1e-5, rtol=1e-5)

    print("KERNEL_OK")
</pallas_src>

<mosaic_0001>
module attributes {stable_mosaic.version = 11 : i64} {
  func.func @_combine_kernel(%arg0: i32, %arg1: memref<2xf32, #tpu.memory_space<smem>>, %arg2: memref<2x1x256xf32, #tpu.memory_space<vmem>>, %arg3: memref<1x256xf32, #tpu.memory_space<vmem>>) attributes {dimension_semantics = [#tpu.dimension_semantics<parallel>], iteration_bounds = array<i64: 1>, scalar_prefetch = 1 : i64, scratch_operands = 0 : i64, tpu.core_type = #tpu.core_type<tc>, window_params = [{transform_indices = @transform_0, window_bounds = array<i64: 2, 1, 256>}, {transform_indices = @transform_1, window_bounds = array<i64: 1, 256>}]} {
    %c0 = arith.constant 0 : index
    %0 = memref.load %arg1[%c0] : memref<2xf32, #tpu.memory_space<smem>>
    %c0_0 = arith.constant 0 : index
    %c0_1 = arith.constant 0 : index
    %c0_2 = arith.constant 0 : index
    %1 = vector.load %arg2[%c0_0, %c0_1, %c0_2] : memref<2x1x256xf32, #tpu.memory_space<vmem>>, vector<1x1x256xf32>
    %2 = vector.shape_cast %1 : vector<1x1x256xf32> to vector<1x256xf32>
    %3 = vector.broadcast %0 : f32 to vector<1x256xf32>
    %4 = arith.mulf %3, %2 : vector<1x256xf32>
    %c1 = arith.constant 1 : index
    %5 = memref.load %arg1[%c1] : memref<2xf32, #tpu.memory_space<smem>>
    %c1_3 = arith.constant 1 : index
    %c0_4 = arith.constant 0 : index
    %c0_5 = arith.constant 0 : index
    %6 = vector.load %arg2[%c1_3, %c0_4, %c0_5] : memref<2x1x256xf32, #tpu.memory_space<vmem>>, vector<1x1x256xf32>
    %7 = vector.shape_cast %6 : vector<1x1x256xf32> to vector<1x256xf32>
    %8 = vector.broadcast %5 : f32 to vector<1x256xf32>
    %9 = arith.mulf %8, %7 : vector<1x256xf32>
    %10 = arith.addf %4, %9 : vector<1x256xf32>
    %c0_6 = arith.constant 0 : index
    %c0_7 = arith.constant 0 : index
    %11 = vector.load %arg3[%c0_6, %c0_7] : memref<1x256xf32, #tpu.memory_space<vmem>>, vector<1x256xf32>
    tpu.vector_store %arg3[%c0_6, %c0_7], %10 {strides = array<i32>} : memref<1x256xf32, #tpu.memory_space<vmem>>, vector<1x256xf32>,
    return
  }
  func.func @transform_0(%arg0: i32, %arg1: memref<2xf32, #tpu.memory_space<smem>>) -> (i32, i32, i32) {
    %c0_i32 = arith.constant 0 : i32
    %c0_i32_0 = arith.constant 0 : i32
    %c0_i32_1 = arith.constant 0 : i32
    return %c0_i32, %arg0, %c0_i32_0 : i32, i32, i32
  }
  func.func @transform_1(%arg0: i32, %arg1: memref<2xf32, #tpu.memory_space<smem>>) -> (i32, i32) {
    %c0_i32 = arith.constant 0 : i32
    %c0_i32_0 = arith.constant 0 : i32
    return %arg0, %c0_i32 : i32, i32
  }
}

</mosaic_0001>

<llo_original>
// kernel: tpu_custom_call.1
$region0: #{tpu_custom_call.1}
  #allocation0 [shape = 'u32[]', space=smem, size = 0x4, offset = 0x4, fixed_abs, tag = 'smem constant byte address 0x4 - core index']
  #allocation1 [shape = 'u32[144,128]{1,0:T(1,128)}', space=vmem, size = 0x12000, scoped, tag = 'internal scratch']
  #allocation2 [shape = 's32[1]{0}', space=sflag, size = 0x4, scoped, tag = 'scoped memory for tpu_custom_call.1']
  #allocation3 [shape = 'u8[512]{0}', space=smem, size = 0x200, scoped, tag = 'prefetched SMEM operand 0']
  %s0 = inlined_call_operand.hbm [shape: f32[2], index: 0, kind: input, shape index: {}]
  %s1 = inlined_call_operand.hbm [shape: f32[2,1,256], index: 1, kind: input, shape index: {}]
  %s2 = inlined_call_operand.hbm [shape: f32[1,256], index: 2, kind: output, shape index: {}]
  %s3 = sld [smem:[#allocation0]]
  $region18: #{tpu_custom_call.1} parent=0
    _
  %s5 = ssub.s32 1, %s3
  %s6 = scalar_select 0, %s5, %s3
  %8 = dma.hbm_to_smem %s0, 16, [#allocation3], [#allocation2]
  %9 = dma.done [#allocation2], 16
  %10 = sfence
  $region1: #{tpu_custom_call.1} parent=0
    #allocation4 [shape = 'u8[2048]{0}', space=vmem, size = 0x800, scoped, tag = 'input window, operand 1, single buffered']
    #allocation5 [shape = 's32[1]{0}', space=sflag, size = 0x4, scoped, tag = 'scoped memory for tpu_custom_call.1']
    #allocation6 [shape = 's32[1]{0}', space=sflag, size = 0x4, scoped, tag = 'scoped memory for tpu_custom_call.1']
    #allocation7 [shape = 'u8[1024]{0}', space=vmem, size = 0x400, scoped, tag = 'output window, operand 0, single buffered']
    %11 = vsyncpa [#allocation5], 0
    %12 = vsyncpa [#allocation6], 0
    // Predicated region
    $region2: #{tpu_custom_call.1} parent=1 // pred_check
      _
    $region3: #{tpu_custom_call.1} parent=1 // pred_check_branch
      %14 = sbr.rel (0) target = $region5
    $region4: #{tpu_custom_call.1} parent=1 // pred_region
      %s16 = ssub.s32 64, 64
      %17 = vsyncadd [#allocation5], %s16
      %s18 = sshll.u32 [#allocation4], 4
      %s19 = int_to_ptr.vmem [resolvable:$true] %s18
      %24 = dma.hbm_to_vmem [thread:$0]  %s1, 64, %s19, [#allocation5], 32, 32, 2
    $region5: #{tpu_custom_call.1} parent=1 // pred_fallthru
      _
    // Predicated region
    $region6: #{tpu_custom_call.1} parent=1 // pred_check
      _
    $region7: #{tpu_custom_call.1} parent=1 // pred_check_branch
      %26 = sbr.rel (0) target = $region9
    $region8: #{tpu_custom_call.1} parent=1 // pred_region
      %27 = dma.done [#allocation5], 64
    $region9: #{tpu_custom_call.1} parent=1 // pred_fallthru
      _
    %s28 = sld [smem:[#allocation3]]
    %v29 = vld [vmem:[#allocation4] sm:$0x3]
    %v30 = vstv %s28
    %v31 = vmul.f32 %v30, %v29
    %s32 = sld [smem:[#allocation3 + $0x1]]
    %s33 = scalar_lea.vmem [#allocation4], 2
    %v34 = vld [vmem:[%s33] sm:$0x3]
    %v35 = vstv %s32
    %v36 = vmul.f32 %v35, %v34
    %v37 = vadd.f32 %v31, %v36
    %v38 = vlaneseq
    %vm39 = vcmp.ge.s32.totalorder %v38, 0
    %vm40 = vcmp.lt.s32.totalorder %v38, 256
    %vm41 = vmand %vm39, %vm40
    %42 = vst.msk [vmem:[#allocation7] sm:$0x3] %vm41, %v37
    // Predicated region
    $region10: #{tpu_custom_call.1} parent=1 // pred_check
      _
    $region11: #{tpu_custom_call.1} parent=1 // pred_check_branch
      %44 = sbr.rel (0) target = $region13
    $region12: #{tpu_custom_call.1} parent=1 // pred_region
      %s46 = ssub.s32 32, 32
      %47 = vsyncadd [#allocation6], %s46
      %s49 = sshll.u32 [#allocation7], 4
      %s50 = int_to_ptr.vmem [resolvable:$true] %s49
      %52 = dma.vmem_to_hbm [thread:$0]  %s50, 32, %s2, [#allocation6]
    $region13: #{tpu_custom_call.1} parent=1 // pred_fallthru
      _
    // Predicated region
    $region14: #{tpu_custom_call.1} parent=1 // pred_check
      _
    $region15: #{tpu_custom_call.1} parent=1 // pred_check_branch
      %54 = sbr.rel (0) target = $region17
    $region16: #{tpu_custom_call.1} parent=1 // pred_region
      %55 = dma.done [#allocation6], 32
    $region17: #{tpu_custom_call.1} parent=1 // pred_fallthru
      _
    %56 = vsyncpa [#allocation5], 1
    %57 = vsyncpa [#allocation6], 1

</llo_original>
